<compile_context>
chip_gen: v6e
topology: v6e:2x2x1
jax: 0.10.0
libtpu: 0.0.40
codegen_flags: <defaults>
</compile_context>

<pallas_src>
import functools
import math

import numpy as np
import jax
import jax.numpy as jnp
from jax.experimental import pallas as pl
from jax.experimental.pallas import tpu as pltpu


# ----------------------------------------------------------------------------
# Kernel: one grid step = `rows` flattened (batch*seq) rows = whole sequences.
# ----------------------------------------------------------------------------
def _encoder_kernel(u_ref, t_ref, wcat_ref, w1_ref, w2_ref, cw_ref, b_ref,
                    y_ref, gamma_ref, final_ref, *, seq_len, dim):
    # u_ref:     (rows, D)       input rows (rows = bt * seq_len)
    # t_ref:     (rows, 1) i32   time index t = row % seq_len (precomputed)
    # wcat_ref:  (D, 2D)         [B^T | Bf^T]   (VMEM-resident across grid)
    # w1/w2/cw:  (1, D)          gate / classifier vectors (resident)
    # b_ref:     (1,) in SMEM    gate bias (scalar)
    # y_ref:     (rows, D)       gated output
    # gamma_ref: (rows, 1)       gate coefficients
    # final_ref: (rows, 1)       sigmoid(classifier(y))
    u = u_ref[...]                                    # (R, D) f32
    rows = u.shape[0]
    t_col = t_ref[...]                                # (R, 1) i32

    # Fused projection: one MXU matmul gives both B(u_t) and Bf(u_t).
    proj = jnp.dot(u, wcat_ref[...], preferred_element_type=jnp.float32)  # (R, 2D)
    xf_lin = proj[:, :dim]                            # B(u_t)
    xb_lin = proj[:, dim:]                            # Bf(u_t)

    # A(.)/Af(.) only ever see the all-zero state tensors in the reference
    # forward, so they contribute nothing (omitted):
    #   x_fwd[t] = u[0]   if t == 0     else B(u[t])
    #   x_bwd[t] = u[S-1] if t == S-1   else Bf(u[t+1])
    x_fwd = jnp.where(t_col == 0, u, xf_lin)

    # One-row "shift up" via an XLU rotate (shift == rows-1 == circular -1).
    # The wrapped rows land only at t == S-1 positions, which are overwritten
    # by the boundary mask below, so cross-sequence wrap is harmless.
    xb_shift = pltpu.roll(xb_lin, shift=rows - 1, axis=0)
    x_bwd = jnp.where(t_col == seq_len - 1, u, xb_shift)

    # gamma = sigmoid(w1 . x_fwd + w2 . x_bwd + b)  — VPU mul + lane reduce.
    bias = b_ref[0]
    logit = (jnp.sum(x_fwd * w1_ref[...], axis=1, keepdims=True)
             + jnp.sum(x_bwd * w2_ref[...], axis=1, keepdims=True) + bias)
    gamma = jax.nn.sigmoid(logit)                     # (R, 1)

    y = gamma * (x_fwd + x_bwd) + (1.0 - gamma) * u   # (R, D)
    final = jax.nn.sigmoid(jnp.sum(y * cw_ref[...], axis=1, keepdims=True))

    y_ref[...] = y
    gamma_ref[...] = gamma
    final_ref[...] = final


def _pick_batch_tile(batch, seq, target_rows):
    """Largest bt dividing batch with bt*seq <= target_rows and an (8,128)-
    friendly sublane extent; falls back to the whole batch in one block."""
    cand = max(1, target_rows // max(seq, 1))
    if cand >= batch:
        return batch
    for bt in range(min(cand, batch), 0, -1):
        if batch % bt == 0 and (bt * seq) % 8 == 0:
            return bt
    return batch


# ----------------------------------------------------------------------------
# Wrapper
# ----------------------------------------------------------------------------
def encoder_forward(u, B_w, Bf_w, w1, w2, b, classifier_w, *, target_rows=512):
    """u: [B, S, D] f32; weights in PyTorch nn.Linear layout ([out, in]).

    Returns (y [B,S,D], gamma [B,S,1], final_output [B,S])."""
    batch, seq, dim = u.shape
    assert classifier_w.shape[0] == 1, "final_dim must be 1 (reference reshape needs it)"
    f32 = jnp.float32

    # Flatten (B, S, D) -> (B*S, D); every grid block holds `bt` complete
    # sequences, so the t==0 / t==S-1 boundary masks and the one-row backward
    # shift stay entirely inside a block.
    u2 = u.astype(f32).reshape(batch * seq, dim)
    t_ids = jnp.tile(jnp.arange(seq, dtype=jnp.int32), batch).reshape(batch * seq, 1)

    # Fused weights: one resident [D, 2D] matmul operand instead of two [D, D].
    wcat = jnp.concatenate(
        [jnp.transpose(B_w), jnp.transpose(Bf_w)], axis=1).astype(f32)
    w1r = jnp.reshape(w1, (1, dim)).astype(f32)
    w2r = jnp.reshape(w2, (1, dim)).astype(f32)
    cwr = jnp.reshape(classifier_w, (1, dim)).astype(f32)
    b1 = jnp.reshape(b, (1,)).astype(f32)

    bt = _pick_batch_tile(batch, seq, target_rows)
    rows = bt * seq
    grid = (batch // bt,)

    # VMEM budget: double-buffered u/y blocks + resident weights + headroom,
    # capped at 64 MiB so it also fits v7x's per-core VMEM.
    block_bytes = rows * dim * 4
    vmem_est = (4 * block_bytes                 # u + y blocks (double buffered)
                + 6 * 2 * rows * 4              # t_ids / gamma / final blocks
                + 2 * (dim * 2 * dim * 4)       # W_cat
                + 2 * 3 * dim * 4)              # w1 / w2 / classifier
    vmem_limit = int(min(64 * 1024 * 1024,
                         max(4 * 1024 * 1024, 2 * vmem_est + (2 << 20))))

    flops = 2 * (batch * seq) * dim * (2 * dim) + 12 * batch * seq * dim
    bytes_accessed = 4 * (2 * batch * seq * dim + 3 * batch * seq
                          + 2 * dim * dim + 3 * dim + 1)

    kernel = functools.partial(_encoder_kernel, seq_len=seq, dim=dim)

    y_flat, gamma_flat, final_flat = pl.pallas_call(
        kernel,
        grid=grid,
        in_specs=[
            pl.BlockSpec((rows, dim), lambda i: (i, 0)),         # u rows
            pl.BlockSpec((rows, 1), lambda i: (i, 0)),           # t = row % S
            pl.BlockSpec((dim, 2 * dim), lambda i: (0, 0)),      # [B^T | Bf^T]
            pl.BlockSpec((1, dim), lambda i: (0, 0)),            # w1
            pl.BlockSpec((1, dim), lambda i: (0, 0)),            # w2
            pl.BlockSpec((1, dim), lambda i: (0, 0)),            # classifier
            pl.BlockSpec(memory_space=pltpu.MemorySpace.SMEM),   # bias scalar
        ],
        out_specs=(
            pl.BlockSpec((rows, dim), lambda i: (i, 0)),         # y
            pl.BlockSpec((rows, 1), lambda i: (i, 0)),           # gamma
            pl.BlockSpec((rows, 1), lambda i: (i, 0)),           # final
        ),
        out_shape=(
            jax.ShapeDtypeStruct((batch * seq, dim), f32),
            jax.ShapeDtypeStruct((batch * seq, 1), f32),
            jax.ShapeDtypeStruct((batch * seq, 1), f32),
        ),
        compiler_params=pltpu.CompilerParams(
            dimension_semantics=("parallel",),
            vmem_limit_bytes=vmem_limit,
        ),
        cost_estimate=pl.CostEstimate(
            flops=flops, transcendentals=2 * batch * seq,
            bytes_accessed=bytes_accessed),
    )(u2, t_ids, wcat, w1r, w2r, cwr, b1)

    y = y_flat.reshape(batch, seq, dim)
    gamma = gamma_flat.reshape(batch, seq, 1)
    final = final_flat.reshape(batch, seq)
    return y, gamma, final


# ----------------------------------------------------------------------------
# Pure-JAX reference (mirrors the PyTorch forward as written)
# ----------------------------------------------------------------------------
def encoder_reference(u, B_w, Bf_w, w1, w2, b, classifier_w):
    hi = jax.lax.Precision.HIGHEST
    xf_lin = jnp.einsum("bsd,ed->bse", u, B_w, precision=hi)
    xb_lin = jnp.einsum("bsd,ed->bse", u, Bf_w, precision=hi)
    x_fwd = jnp.concatenate([u[:, :1], xf_lin[:, 1:]], axis=1)
    x_bwd = jnp.concatenate([xb_lin[:, 1:], u[:, -1:]], axis=1)
    gamma = jax.nn.sigmoid(
        jnp.einsum("bsd,od->bso", x_fwd, w1, precision=hi)
        + jnp.einsum("bsd,od->bso", x_bwd, w2, precision=hi)
        + jnp.reshape(b, (1, 1, 1)))
    y = gamma * (x_fwd + x_bwd) + (1.0 - gamma) * u
    final = jax.nn.sigmoid(
        jnp.einsum("bsd,od->bso", y, classifier_w, precision=hi))[..., 0]
    return y, gamma, final


# ----------------------------------------------------------------------------
# Demo / self-check
# ----------------------------------------------------------------------------
if __name__ == "__main__":
    BATCH, SEQ, DIM = 2, 8, 32   # batch=2, seq_len=8, input_dim=state_dim=32
    key = jax.random.PRNGKey(0)
    k_u, k_u2, k_bw, k_bfw, k_w1, k_w2, k_cls, k_bias = jax.random.split(key, 8)
    lim = 1.0 / math.sqrt(DIM)

    u = jax.random.normal(k_u, (BATCH, SEQ, DIM), dtype=jnp.float32)
    B_w = jax.random.uniform(k_bw, (DIM, DIM), jnp.float32, -lim, lim)
    Bf_w = jax.random.uniform(k_bfw, (DIM, DIM), jnp.float32, -lim, lim)
    w1 = jax.random.uniform(k_w1, (1, DIM), jnp.float32, -lim, lim)
    w2 = jax.random.uniform(k_w2, (1, DIM), jnp.float32, -lim, lim)
    classifier_w = jax.random.uniform(k_cls, (1, DIM), jnp.float32, -lim, lim)
    bias = 0.1 * jax.random.normal(k_bias, (1,), jnp.float32)
    # NOTE: the module's A / Af weights only ever multiply the all-zero state
    # tensors in the reference forward, so they never affect the outputs and
    # are omitted from the kernel.

    run = jax.jit(encoder_forward, static_argnames=("target_rows",))

    # --- single-block configuration (whole batch per grid step) ------------
    y, gamma, final = run(u, B_w, Bf_w, w1, w2, bias, classifier_w)
    jax.block_until_ready((y, gamma, final))

    y_ref, g_ref, f_ref = encoder_reference(u, B_w, Bf_w, w1, w2, bias, classifier_w)
    np.testing.assert_allclose(np.asarray(y), np.asarray(y_ref), rtol=1e-5, atol=1e-5)
    np.testing.assert_allclose(np.asarray(gamma), np.asarray(g_ref), rtol=1e-5, atol=1e-5)
    np.testing.assert_allclose(np.asarray(final), np.asarray(f_ref), rtol=1e-5, atol=1e-5)
    assert y.shape == (BATCH, SEQ, DIM)
    assert gamma.shape == (BATCH, SEQ, 1)
    assert final.shape == (BATCH, SEQ)

    # --- multi-block configuration (grid > 1) to exercise batch tiling ------
    u4 = jax.random.normal(k_u2, (4, SEQ, DIM), dtype=jnp.float32)
    y4, g4, f4 = run(u4, B_w, Bf_w, w1, w2, bias, classifier_w, target_rows=SEQ)
    jax.block_until_ready((y4, g4, f4))
    y4_ref, g4_ref, f4_ref = encoder_reference(u4, B_w, Bf_w, w1, w2, bias, classifier_w)
    np.testing.assert_allclose(np.asarray(y4), np.asarray(y4_ref), rtol=1e-5, atol=1e-5)
    np.testing.assert_allclose(np.asarray(g4), np.asarray(g4_ref), rtol=1e-5, atol=1e-5)
    np.testing.assert_allclose(np.asarray(f4), np.asarray(f4_ref), rtol=1e-5, atol=1e-5)

    print("KERNEL_OK")
</pallas_src>

<mosaic_0001>
module attributes {stable_mosaic.version = 11 : i64} {
  func.func @_encoder_kernel(%arg0: i32, %arg1: memref<16x32xf32, #tpu.memory_space<vmem>>, %arg2: memref<16x1xi32, #tpu.memory_space<vmem>>, %arg3: memref<32x64xf32, #tpu.memory_space<vmem>>, %arg4: memref<1x32xf32, #tpu.memory_space<vmem>>, %arg5: memref<1x32xf32, #tpu.memory_space<vmem>>, %arg6: memref<1x32xf32, #tpu.memory_space<vmem>>, %arg7: memref<1xf32, #tpu.memory_space<smem>>, %arg8: memref<16x32xf32, #tpu.memory_space<vmem>>, %arg9: memref<16x1xf32, #tpu.memory_space<vmem>>, %arg10: memref<16x1xf32, #tpu.memory_space<vmem>>) attributes {dimension_semantics = [#tpu.dimension_semantics<parallel>], iteration_bounds = array<i64: 1>, scalar_prefetch = 0 : i64, scratch_operands = 0 : i64, tpu.core_type = #tpu.core_type<tc>, window_params = [{transform_indices = @transform_0, window_bounds = array<i64: 16, 32>}, {transform_indices = @transform_1, window_bounds = array<i64: 16, 1>}, {pipeline_mode = #tpu.pipeline_mode<synchronous>, transform_indices = @transform_2, window_bounds = array<i64: 32, 64>}, {pipeline_mode = #tpu.pipeline_mode<synchronous>, transform_indices = @transform_3, window_bounds = array<i64: 1, 32>}, {pipeline_mode = #tpu.pipeline_mode<synchronous>, transform_indices = @transform_4, window_bounds = array<i64: 1, 32>}, {pipeline_mode = #tpu.pipeline_mode<synchronous>, transform_indices = @transform_5, window_bounds = array<i64: 1, 32>}, {transform_indices = @transform_6, window_bounds = array<i64: 1>}, {transform_indices = @transform_7, window_bounds = array<i64: 16, 32>}, {transform_indices = @transform_8, window_bounds = array<i64: 16, 1>}, {transform_indices = @transform_9, window_bounds = array<i64: 16, 1>}]} {
    %c0 = arith.constant 0 : index
    %c0_0 = arith.constant 0 : index
    %0 = vector.load %arg1[%c0, %c0_0] : memref<16x32xf32, #tpu.memory_space<vmem>>, vector<16x32xf32>
    %c0_1 = arith.constant 0 : index
    %c0_2 = arith.constant 0 : index
    %1 = vector.load %arg2[%c0_1, %c0_2] : memref<16x1xi32, #tpu.memory_space<vmem>>, vector<16x1xi32>
    %c0_3 = arith.constant 0 : index
    %c0_4 = arith.constant 0 : index
    %2 = vector.load %arg3[%c0_3, %c0_4] : memref<32x64xf32, #tpu.memory_space<vmem>>, vector<32x64xf32>
    %cst = arith.constant dense<0.000000e+00> : vector<16x64xf32>
    %3 = tpu.matmul %0, %2, %cst {dimension_numbers = #tpu.dot_dimension_numbers<[1], [0], [0], [1], [0, 0, 1, 1], [], []>} : vector<16x32xf32>, vector<32x64xf32>, vector<16x64xf32> -> vector<16x64xf32>
    %4 = vector.extract_strided_slice %3 {offsets = [0, 0], sizes = [16, 32], strides = [1, 1]} : vector<16x64xf32> to vector<16x32xf32>
    %5 = vector.extract_strided_slice %3 {offsets = [0, 32], sizes = [16, 32], strides = [1, 1]} : vector<16x64xf32> to vector<16x32xf32>
    %c0_i32 = arith.constant 0 : i32
    %6 = vector.broadcast %c0_i32 : i32 to vector<16x1xi32>
    %7 = arith.cmpi eq, %1, %6 : vector<16x1xi32>
    %8 = vector.shape_cast %7 : vector<16x1xi1> to vector<16x1xi1>
    %9 = vector.broadcast %8 : vector<16x1xi1> to vector<16x32xi1>
    %10 = arith.select %9, %0, %4 : vector<16x32xi1>, vector<16x32xf32>
    %c15_i32 = arith.constant 15 : i32
    %11 = tpu.dynamic_rotate %5 by %c15_i32 dim 0 : vector<16x32xf32>, i32 -> vector<16x32xf32>
    %c7_i32 = arith.constant 7 : i32
    %12 = vector.broadcast %c7_i32 : i32 to vector<16x1xi32>
    %13 = arith.cmpi eq, %1, %12 : vector<16x1xi32>
    %14 = vector.shape_cast %13 : vector<16x1xi1> to vector<16x1xi1>
    %15 = vector.broadcast %14 : vector<16x1xi1> to vector<16x32xi1>
    %16 = arith.select %15, %0, %11 : vector<16x32xi1>, vector<16x32xf32>
    %c0_5 = arith.constant 0 : index
    %17 = memref.load %arg7[%c0_5] : memref<1xf32, #tpu.memory_space<smem>>
    %c0_6 = arith.constant 0 : index
    %c0_7 = arith.constant 0 : index
    %18 = vector.load %arg4[%c0_6, %c0_7] : memref<1x32xf32, #tpu.memory_space<vmem>>, vector<1x32xf32>
    %19 = vector.broadcast %18 : vector<1x32xf32> to vector<16x32xf32>
    %20 = arith.mulf %10, %19 : vector<16x32xf32>
    %cst_8 = arith.constant dense<0.000000e+00> : vector<16xf32>
    %21 = vector.multi_reduction <add>, %20, %cst_8 [1] : vector<16x32xf32> to vector<16xf32>
    %22 = vector.shape_cast %21 : vector<16xf32> to vector<16x1xf32>
    %c0_9 = arith.constant 0 : index
    %c0_10 = arith.constant 0 : index
    %23 = vector.load %arg5[%c0_9, %c0_10] : memref<1x32xf32, #tpu.memory_space<vmem>>, vector<1x32xf32>
    %24 = vector.broadcast %23 : vector<1x32xf32> to vector<16x32xf32>
    %25 = arith.mulf %16, %24 : vector<16x32xf32>
    %cst_11 = arith.constant dense<0.000000e+00> : vector<16xf32>
    %26 = vector.multi_reduction <add>, %25, %cst_11 [1] : vector<16x32xf32> to vector<16xf32>
    %27 = vector.shape_cast %26 : vector<16xf32> to vector<16x1xf32>
    %28 = arith.addf %22, %27 : vector<16x1xf32>
    %29 = vector.broadcast %17 : f32 to vector<16x1xf32>
    %30 = arith.addf %28, %29 : vector<16x1xf32>
    %31 = arith.negf %30 : vector<16x1xf32>
    %32 = math.exp %31 : vector<16x1xf32>
    %cst_12 = arith.constant 1.000000e+00 : f32
    %33 = vector.broadcast %cst_12 : f32 to vector<16x1xf32>
    %34 = arith.addf %33, %32 : vector<16x1xf32>
    %35 = arith.divf %33, %34 : vector<16x1xf32>
    %36 = arith.addf %10, %16 : vector<16x32xf32>
    %37 = vector.broadcast %35 : vector<16x1xf32> to vector<16x32xf32>
    %38 = arith.mulf %37, %36 : vector<16x32xf32>
    %cst_13 = arith.constant 1.000000e+00 : f32
    %39 = vector.broadcast %cst_13 : f32 to vector<16x1xf32>
    %40 = arith.subf %39, %35 : vector<16x1xf32>
    %41 = vector.broadcast %40 : vector<16x1xf32> to vector<16x32xf32>
    %42 = arith.mulf %41, %0 : vector<16x32xf32>
    %43 = arith.addf %38, %42 : vector<16x32xf32>
    %c0_14 = arith.constant 0 : index
    %c0_15 = arith.constant 0 : index
    %44 = vector.load %arg6[%c0_14, %c0_15] : memref<1x32xf32, #tpu.memory_space<vmem>>, vector<1x32xf32>
    %45 = vector.broadcast %44 : vector<1x32xf32> to vector<16x32xf32>
    %46 = arith.mulf %43, %45 : vector<16x32xf32>
    %cst_16 = arith.constant dense<0.000000e+00> : vector<16xf32>
    %47 = vector.multi_reduction <add>, %46, %cst_16 [1] : vector<16x32xf32> to vector<16xf32>
    %48 = vector.shape_cast %47 : vector<16xf32> to vector<16x1xf32>
    %49 = arith.negf %48 : vector<16x1xf32>
    %50 = math.exp %49 : vector<16x1xf32>
    %cst_17 = arith.constant 1.000000e+00 : f32
    %51 = vector.broadcast %cst_17 : f32 to vector<16x1xf32>
    %52 = arith.addf %51, %50 : vector<16x1xf32>
    %53 = arith.divf %51, %52 : vector<16x1xf32>
    %c0_18 = arith.constant 0 : index
    %c0_19 = arith.constant 0 : index
    %54 = vector.load %arg8[%c0_18, %c0_19] : memref<16x32xf32, #tpu.memory_space<vmem>>, vector<16x32xf32>
    tpu.vector_store %arg8[%c0_18, %c0_19], %43 {strides = array<i32>} : memref<16x32xf32, #tpu.memory_space<vmem>>, vector<16x32xf32>,
    %c0_20 = arith.constant 0 : index
    %c0_21 = arith.constant 0 : index
    %55 = vector.load %arg9[%c0_20, %c0_21] : memref<16x1xf32, #tpu.memory_space<vmem>>, vector<16x1xf32>
    tpu.vector_store %arg9[%c0_20, %c0_21], %35 {strides = array<i32>} : memref<16x1xf32, #tpu.memory_space<vmem>>, vector<16x1xf32>,
    %c0_22 = arith.constant 0 : index
    %c0_23 = arith.constant 0 : index
    %56 = vector.load %arg10[%c0_22, %c0_23] : memref<16x1xf32, #tpu.memory_space<vmem>>, vector<16x1xf32>
    tpu.vector_store %arg10[%c0_22, %c0_23], %53 {strides = array<i32>} : memref<16x1xf32, #tpu.memory_space<vmem>>, vector<16x1xf32>,
    return
  }
  func.func @transform_0(%arg0: i32) -> (i32, i32) {
    %c0_i32 = arith.constant 0 : i32
    %c0_i32_0 = arith.constant 0 : i32
    return %arg0, %c0_i32 : i32, i32
  }
  func.func @transform_1(%arg0: i32) -> (i32, i32) {
    %c0_i32 = arith.constant 0 : i32
    %c0_i32_0 = arith.constant 0 : i32
    return %arg0, %c0_i32 : i32, i32
  }
  func.func @transform_2(%arg0: i32) -> (i32, i32) {
    %c0_i32 = arith.constant 0 : i32
    %c0_i32_0 = arith.constant 0 : i32
    %c0_i32_1 = arith.constant 0 : i32
    return %c0_i32, %c0_i32_0 : i32, i32
  }
  func.func @transform_3(%arg0: i32) -> (i32, i32) {
    %c0_i32 = arith.constant 0 : i32
    %c0_i32_0 = arith.constant 0 : i32
    %c0_i32_1 = arith.constant 0 : i32
    return %c0_i32, %c0_i32_0 : i32, i32
  }
  func.func @transform_4(%arg0: i32) -> (i32, i32) {
    %c0_i32 = arith.constant 0 : i32
    %c0_i32_0 = arith.constant 0 : i32
    %c0_i32_1 = arith.constant 0 : i32
    return %c0_i32, %c0_i32_0 : i32, i32
  }
  func.func @transform_5(%arg0: i32) -> (i32, i32) {
    %c0_i32 = arith.constant 0 : i32
    %c0_i32_0 = arith.constant 0 : i32
    %c0_i32_1 = arith.constant 0 : i32
    return %c0_i32, %c0_i32_0 : i32, i32
  }
  func.func @transform_6(%arg0: i32) -> i32 {
    %c0_i32 = arith.constant 0 : i32
    %c0_i32_0 = arith.constant 0 : i32
    return %c0_i32 : i32
  }
  func.func @transform_7(%arg0: i32) -> (i32, i32) {
    %c0_i32 = arith.constant 0 : i32
    %c0_i32_0 = arith.constant 0 : i32
    return %arg0, %c0_i32 : i32, i32
  }
  func.func @transform_8(%arg0: i32) -> (i32, i32) {
    %c0_i32 = arith.constant 0 : i32
    %c0_i32_0 = arith.constant 0 : i32
    return %arg0, %c0_i32 : i32, i32
  }
  func.func @transform_9(%arg0: i32) -> (i32, i32) {
    %c0_i32 = arith.constant 0 : i32
    %c0_i32_0 = arith.constant 0 : i32
    return %arg0, %c0_i32 : i32, i32
  }
}

</mosaic_0001>

<llo_original>
// kernel: tile.0
$region0: #{tile.0}
  %s0 = inlined_call_operand.vmem [shape: s32[2,8], index: 0, kind: input, shape index: {}]
  %s1 = inlined_call_operand.vmem [shape: s32[16,1], index: 1, kind: output, shape index: {}]
  $region1: #{tile.0} parent=0
    #allocation0 [shape = 'u8[4096]{0}', space=vmem, size = 0x1000, scoped, tag = 'scoped mem for input reshape']
    %s3 = sshll.u32 1, 2
    %s4 = ssub.s32 %s3, 1
    %v5 = vld [vmem:[%s0] sm:%s4]
    %6 = vst [vmem:[#allocation0] sm:%s4] %v5
    %v7 = vld [vmem:[#allocation0] sm:$0x3]
    %vm8 = vcmask 7168
    %9 = vst.msk [vmem:[%s1] ss:$8 sm:$0x3] %vm8, %v7
    %v10 = vld [vmem:[#allocation0] sm:$0x3]
    %11 = vrot.lane.b32.xlu0 %v10, 127
    %v12 = vpop.permute.xlu0 %11
    %vm13 = vcmask 7168
    %s14 = scalar_lea.vmem %s1, 1
    %15 = vst.msk [vmem:[%s14] ss:$8 sm:$0x3] %vm13, %v12
    %v16 = vld [vmem:[#allocation0] sm:$0x3]
    %17 = vrot.lane.b32.xlu0 %v16, 126
    %v18 = vpop.permute.xlu0 %17
    %vm19 = vcmask 7168
    %s20 = scalar_lea.vmem %s1, 2
    %21 = vst.msk [vmem:[%s20] ss:$8 sm:$0x3] %vm19, %v18
    %v22 = vld [vmem:[#allocation0] sm:$0x3]
    %23 = vrot.lane.b32.xlu0 %v22, 125
    %v24 = vpop.permute.xlu0 %23
    %vm25 = vcmask 7168
    %s26 = scalar_lea.vmem %s1, 3
    %27 = vst.msk [vmem:[%s26] ss:$8 sm:$0x3] %vm25, %v24
    %v28 = vld [vmem:[#allocation0] sm:$0x3]
    %29 = vrot.lane.b32.xlu0 %v28, 124
    %v30 = vpop.permute.xlu0 %29
    %vm31 = vcmask 7168
    %s32 = scalar_lea.vmem %s1, 4
    %33 = vst.msk [vmem:[%s32] ss:$8 sm:$0x3] %vm31, %v30
    %v34 = vld [vmem:[#allocation0] sm:$0x3]
    %35 = vrot.lane.b32.xlu0 %v34, 123
    %v36 = vpop.permute.xlu0 %35
    %vm37 = vcmask 7168
    %s38 = scalar_lea.vmem %s1, 5
    %39 = vst.msk [vmem:[%s38] ss:$8 sm:$0x3] %vm37, %v36
    %v40 = vld [vmem:[#allocation0] sm:$0x3]
    %41 = vrot.lane.b32.xlu0 %v40, 122
    %v42 = vpop.permute.xlu0 %41
    %vm43 = vcmask 7168
    %s44 = scalar_lea.vmem %s1, 6
    %45 = vst.msk [vmem:[%s44] ss:$8 sm:$0x3] %vm43, %v42
    %v46 = vld [vmem:[#allocation0] sm:$0x3]
    %47 = vrot.lane.b32.xlu0 %v46, 121
    %v48 = vpop.permute.xlu0 %47
    %vm49 = vcmask 7168
    %s50 = scalar_lea.vmem %s1, 7
    %51 = vst.msk [vmem:[%s50] ss:$8 sm:$0x3] %vm49, %v48

// kernel: encoder_forward.1
$region0: #{encoder_forward.1}
  #allocation0 [shape = 'u32[]', space=smem, size = 0x4, offset = 0x4, fixed_abs, tag = 'smem constant byte address 0x4 - core index']
  #allocation1 [shape = 'u32[144,128]{1,0:T(1,128)}', space=vmem, size = 0x12000, scoped, tag = 'internal scratch']
  #allocation2 [shape = 'f32[1]{0:T(128)S(6)}', space=smem, size = 0x200, scoped, tag = 'scoped memory for encoder_forward.1']
  %s0 = inlined_call_operand.vmem [shape: f32[16,32], index: 0, kind: input, shape index: {}]
  %s1 = inlined_call_operand.vmem [shape: s32[16,1], index: 1, kind: input, shape index: {}]
  %s2 = inlined_call_operand.vmem [shape: f32[32,64], index: 2, kind: input, shape index: {}]
  %s3 = inlined_call_operand.vmem [shape: f32[1,32], index: 3, kind: input, shape index: {}]
  %s4 = inlined_call_operand.vmem [shape: f32[1,32], index: 4, kind: input, shape index: {}]
  %s5 = inlined_call_operand.vmem [shape: f32[1,32], index: 5, kind: input, shape index: {}]
  %s6 = inlined_call_operand.<no memory space> [shape: f32[1], index: 6, kind: input, shape index: {}]
  %s7 = inlined_call_operand.hbm [shape: f32[16,32], index: 7, kind: output, shape index: {0}]
  %s8 = inlined_call_operand.vmem [shape: f32[16,1], index: 8, kind: output, shape index: {1}]
  %s9 = inlined_call_operand.vmem [shape: f32[16,1], index: 9, kind: output, shape index: {2}]
  %10 = xla_tuple %s7, %s8, %s9
  %s11 = sld [smem:[#allocation0]]
  $region54: #{encoder_forward.1} parent=0
    _
  %s13 = ssub.s32 1, %s11
  %s14 = scalar_select 0, %s13, %s11
  %15 = sst [smem:[#allocation2]] %s6
  $region1: #{encoder_forward.1} parent=0
    #allocation3 [shape = 'u8[8192]{0}', space=vmem, size = 0x2000, scoped, tag = 'output window, operand 0, single buffered']
    #allocation4 [shape = 's32[1]{0}', space=sflag, size = 0x4, scoped, tag = 'scoped memory for encoder_forward.1']
    %16 = vsyncpa [#allocation4], 0
    // Predicated region
    $region2: #{encoder_forward.1} parent=1 // pred_check
      _
    $region3: #{encoder_forward.1} parent=1 // pred_check_branch
      %18 = sbr.rel (0) target = $region5
    $region4: #{encoder_forward.1} parent=1 // pred_region
      _
    $region5: #{encoder_forward.1} parent=1 // pred_fallthru
      _
    // Predicated region
    $region6: #{encoder_forward.1} parent=1 // pred_check
      _
    $region7: #{encoder_forward.1} parent=1 // pred_check_branch
      %20 = sbr.rel (0) target = $region9
    $region8: #{encoder_forward.1} parent=1 // pred_region
      _
    $region9: #{encoder_forward.1} parent=1 // pred_fallthru
      _
    // Predicated region
    $region10: #{encoder_forward.1} parent=1 // pred_check
      _
    $region11: #{encoder_forward.1} parent=1 // pred_check_branch
      %22 = sbr.rel (0) target = $region13
    $region12: #{encoder_forward.1} parent=1 // pred_region
      _
    $region13: #{encoder_forward.1} parent=1 // pred_fallthru
      _
    // Predicated region
    $region14: #{encoder_forward.1} parent=1 // pred_check
      _
    $region15: #{encoder_forward.1} parent=1 // pred_check_branch
      %24 = sbr.rel (0) target = $region17
    $region16: #{encoder_forward.1} parent=1 // pred_region
      _
    $region17: #{encoder_forward.1} parent=1 // pred_fallthru
      _
    // Predicated region
    $region18: #{encoder_forward.1} parent=1 // pred_check
      _
    $region19: #{encoder_forward.1} parent=1 // pred_check_branch
      %26 = sbr.rel (0) target = $region21
    $region20: #{encoder_forward.1} parent=1 // pred_region
      _
    $region21: #{encoder_forward.1} parent=1 // pred_fallthru
      _
    // Predicated region
    $region22: #{encoder_forward.1} parent=1 // pred_check
      _
    $region23: #{encoder_forward.1} parent=1 // pred_check_branch
      %28 = sbr.rel (0) target = $region25
    $region24: #{encoder_forward.1} parent=1 // pred_region
      _
    $region25: #{encoder_forward.1} parent=1 // pred_fallthru
      _
    // Predicated region
    $region26: #{encoder_forward.1} parent=1 // pred_check
      _
    $region27: #{encoder_forward.1} parent=1 // pred_check_branch
      %30 = sbr.rel (0) target = $region29
    $region28: #{encoder_forward.1} parent=1 // pred_region
      _
    $region29: #{encoder_forward.1} parent=1 // pred_fallthru
      _
    %v31 = vld [vmem:[%s0] sm:$0xff]
    %v32 = vld [vmem:[%s0 + $0x8] sm:$0xff]
    %v33 = vld [vmem:[%s1] sm:$0xff]
    %v34 = vld [vmem:[%s1 + $0x8] sm:$0xff]
    %v35 = vld [vmem:[%s2] sm:$0xff]
    %v36 = vld [vmem:[%s2 + $0x8] sm:$0xff]
    %v37 = vld [vmem:[%s2 + $0x10] sm:$0xff]
    %v38 = vld [vmem:[%s2 + $0x18] sm:$0xff]
    %vm39 = vcmask 261120
    %v41 = vsel %vm39, %v31, 0
    %v44 = vsel %vm39, %v32, 0
    %46 = vmatprep.subr.mxu0 0.0
    %47 = vmatpush1.msra.mxu0 0.0
    %48 = vmatprep.subr.mxu0 0.0
    %49 = vmatpush1.msra.mxu0 0.0
    %50 = vmatprep.subr.mxu0 0.0
    %51 = vmatpush1.msra.mxu0 0.0
    %52 = vmatprep.subr.mxu0 0.0
    %53 = vmatpush1.msra.mxu0 0.0
    %54 = vmatprep.subr.mxu0 0.0
    %55 = vmatpush1.msra.mxu0 0.0
    %56 = vmatprep.subr.mxu0 0.0
    %57 = vmatpush1.msra.mxu0 0.0
    %58 = vmatprep.subr.mxu0 0.0
    %59 = vmatpush1.msra.mxu0 0.0
    %60 = vmatprep.subr.mxu0 0.0
    %61 = vmatpush1.msra.mxu0 0.0
    %62 = vmatprep.subr.mxu0 0.0
    %63 = vmatpush1.msra.mxu0 0.0
    %64 = vmatprep.subr.mxu0 0.0
    %65 = vmatpush1.msra.mxu0 0.0
    %66 = vmatprep.subr.mxu0 0.0
    %67 = vmatpush1.msra.mxu0 0.0
    %68 = vmatprep.subr.mxu0 0.0
    %69 = vmatpush1.msra.mxu0 0.0
    %70 = vmatprep.subr.mxu0 0.0
    %71 = vmatpush1.msra.mxu0 %v38
    %72 = vmatprep.subr.mxu0 0.0
    %73 = vmatpush1.msra.mxu0 %v37
    %74 = vmatprep.subr.mxu0 0.0
    %75 = vmatpush1.msra.mxu0 %v36
    %76 = vmatprep.subr.mxu0 0.0
    %77 = vmatpush1.msra.mxu0 %v35
    %78 = vmatprep.subr.mxu0 0.0
    %79 = vmatpush2.msra.mxu0 0.0
    %80 = vmatprep.subr.mxu0 0.0
    %81 = vmatpush2.msra.mxu0 0.0
    %82 = vmatprep.subr.mxu0 0.0
    %83 = vmatpush2.msra.mxu0 0.0
    %84 = vmatprep.subr.mxu0 0.0
    %85 = vmatpush2.msra.mxu0 0.0
    %86 = vmatprep.subr.mxu0 0.0
    %87 = vmatpush2.msra.mxu0 0.0
    %88 = vmatprep.subr.mxu0 0.0
    %89 = vmatpush2.msra.mxu0 0.0
    %90 = vmatprep.subr.mxu0 0.0
    %91 = vmatpush2.msra.mxu0 0.0
    %92 = vmatprep.subr.mxu0 0.0
    %93 = vmatpush2.msra.mxu0 0.0
    %94 = vmatprep.subr.mxu0 0.0
    %95 = vmatpush2.msra.mxu0 0.0
    %96 = vmatprep.subr.mxu0 0.0
    %97 = vmatpush2.msra.mxu0 0.0
    %98 = vmatprep.subr.mxu0 0.0
    %99 = vmatpush2.msra.mxu0 0.0
    %100 = vmatprep.subr.mxu0 0.0
    %101 = vmatpush2.msra.mxu0 0.0
    %102 = vmatprep.subr.mxu0 0.0
    %103 = vmatpush2.msra.mxu0 0.0
    %104 = vmatprep.subr.mxu0 0.0
    %105 = vmatpush2.msra.mxu0 0.0
    %106 = vmatprep.subr.mxu0 0.0
    %107 = vmatpush2.msra.mxu0 0.0
    %108 = vmatprep.subr.mxu0 0.0
    %109 = vmatpush2.msra.mxu0 0.0
    %110 = vmatprep.mubr.f32.mxu0 0.0
    %111 = vmatmul.mubr.f32.gmra.mxu0 %v41
    %v112 = vpop.f32.mrf.mxu0
    %v113 = vadd.f32 0.0, %v112
    %v114 = vpop.f32.mrf.mxu0
    %115 = vmatprep.mubr.f32.mxu0 0.0
    %116 = vmatmul.mubr.f32.gmra.mxu0 %v44
    %v117 = vpop.f32.mrf.mxu0
    %v118 = vadd.f32 0.0, %v117
    %v119 = vpop.f32.mrf.mxu0
    %120 = vdwg.mxu0
    %vm121 = vcmp.eq.s32.totalorder %v33, 0
    %vm122 = vcmp.eq.s32.totalorder %v34, 0
    %v123 = vsel %vm121, 1, 0
    %v124 = vsel %vm122, 1, 0
    %125 = vset.pattern.permute.xlu0 0
    %126 = vperm.xlu0 %125, %v123
    %v127 = vpop.permute.xlu0 %126
    %128 = vset.pattern.permute.xlu0 0
    %129 = vperm.xlu0 %128, %v124
    %v130 = vpop.permute.xlu0 %129
    %vm131 = vcmp.eq.s32.totalorder %v127, 1
    %vm132 = vcmp.eq.s32.totalorder %v130, 1
    %v133 = vsel %vm131, %v31, %v113
    %v134 = vsel %vm132, %v32, %v118
    %137 = vrot.lane.b32.xlu0 %v113, 96
    %v138 = vpop.permute.xlu0 %137
    %139 = vrot.lane.b32.xlu0 %v118, 96
    %v140 = vpop.permute.xlu0 %139
    %v143 = vrot.slane %v138, 1
    %v144 = vrot.slane %v140, 1
    %v145 = vlaneseq
    %v146 = vshrl.u32 %v145, 7
    %vm147 = vcmp.lt.s32.totalorder %v146, 7
    %v148 = vsel %vm147, %v143, %v144
    %v149 = vsel %vm147, %v144, %v143
    %vm150 = vcmp.eq.s32.totalorder %v33, 7
    %vm151 = vcmp.eq.s32.totalorder %v34, 7
    %v152 = vsel %vm150, 1, 0
    %v153 = vsel %vm151, 1, 0
    %154 = vset.pattern.permute.xlu0 0
    %155 = vperm.xlu0 %154, %v152
    %v156 = vpop.permute.xlu0 %155
    %157 = vset.pattern.permute.xlu0 0
    %158 = vperm.xlu0 %157, %v153
    %v159 = vpop.permute.xlu0 %158
    %vm160 = vcmp.eq.s32.totalorder %v156, 1
    %vm161 = vcmp.eq.s32.totalorder %v159, 1
    %v162 = vsel %vm160, %v31, %v148
    %v163 = vsel %vm161, %v32, %v149
    %s164 = sld [smem:[#allocation2]]
    %v165 = vld [vmem:[%s3] sm:$0x1]
    %v167 = vlaneseq
    %v168 = vshrl.u32 %v167, 7
    %v169 = vsub.s32 0, %v168
    %v170 = vrot.slane %v165, %v169
    %v172 = vmul.f32 %v133, %v170
    %v173 = vmul.f32 %v134, %v170
    %v174 = vsel %vm39, %v172, 0.0
    %175 = vadd.xlane.f32.xlu0 %v174
    %v176 = vpop.xlane.xlu0 %175
    %v177 = vsel %vm39, %v173, 0.0
    %178 = vadd.xlane.f32.xlu0 %v177
    %v179 = vpop.xlane.xlu0 %178
    %v180 = vld [vmem:[%s4] sm:$0x1]
    %v182 = vlaneseq
    %v183 = vshrl.u32 %v182, 7
    %v184 = vsub.s32 0, %v183
    %v185 = vrot.slane %v180, %v184
    %v187 = vmul.f32 %v162, %v185
    %v188 = vmul.f32 %v163, %v185
    %v189 = vsel %vm39, %v187, 0.0
    %190 = vadd.xlane.f32.xlu0 %v189
    %v191 = vpop.xlane.xlu0 %190
    %v192 = vsel %vm39, %v188, 0.0
    %193 = vadd.xlane.f32.xlu0 %v192
    %v194 = vpop.xlane.xlu0 %193
    %v195 = vadd.f32 %v176, %v191
    %v196 = vadd.f32 %v179, %v194
    %v197 = vstv %s164
    %v198 = vadd.f32 %v195, %v197
    %v199 = vadd.f32 %v196, %v197
    %v200 = vxor.u32 %v198, 2147483648
    %v201 = vxor.u32 %v199, 2147483648
    %v202 = vmul.f32 %v200, 1.442695
    %v203 = vpow.pop %v202
    %v204 = vmul.f32 %v201, 1.442695
    %v205 = vpow.pop %v204
    %v206 = vadd.f32 %v203, 1.0
    %v207 = vadd.f32 %v205, 1.0
    %v208 = vrcp.pop %v206
    %v209 = vmul.f32 1.0, %v208
    %v210 = vrcp.pop %v207
    %v211 = vmul.f32 1.0, %v210
    %v212 = vadd.f32 %v133, %v162
    %v213 = vadd.f32 %v134, %v163
    %v214 = vmul.f32 %v209, %v212
    %v215 = vmul.f32 %v211, %v213
    %v216 = vsub.f32 1.0, %v209
    %v217 = vsub.f32 1.0, %v211
    %v218 = vmul.f32 %v216, %v31
    %v219 = vmul.f32 %v217, %v32
    %v220 = vadd.f32 %v214, %v218
    %v221 = vadd.f32 %v215, %v219
    %v222 = vld [vmem:[%s5] sm:$0x1]
    %v224 = vlaneseq
    %v225 = vshrl.u32 %v224, 7
    %v226 = vsub.s32 0, %v225
    %v227 = vrot.slane %v222, %v226
    %v229 = vmul.f32 %v220, %v227
    %v230 = vmul.f32 %v221, %v227
    %v231 = vsel %vm39, %v229, 0.0
    %232 = vadd.xlane.f32.xlu0 %v231
    %v233 = vpop.xlane.xlu0 %232
    %v234 = vsel %vm39, %v230, 0.0
    %235 = vadd.xlane.f32.xlu0 %v234
    %v236 = vpop.xlane.xlu0 %235
    %v237 = vxor.u32 %v233, 2147483648
    %v238 = vxor.u32 %v236, 2147483648
    %v239 = vmul.f32 %v237, 1.442695
    %v240 = vpow.pop %v239
    %v241 = vmul.f32 %v238, 1.442695
    %v242 = vpow.pop %v241
    %v243 = vadd.f32 %v240, 1.0
    %v244 = vadd.f32 %v242, 1.0
    %v245 = vrcp.pop %v243
    %v246 = vmul.f32 1.0, %v245
    %v247 = vrcp.pop %v244
    %v248 = vmul.f32 1.0, %v247
    %249 = vst.msk [vmem:[#allocation3] sm:$0xff] %vm39, %v220
    %250 = vst.msk [vmem:[#allocation3 + $0x8] sm:$0xff] %vm39, %v221
    %vm251 = vcmask 7168
    %252 = vst.msk [vmem:[%s8] sm:$0xff] %vm251, %v209
    %253 = vst.msk [vmem:[%s8 + $0x8] sm:$0xff] %vm251, %v211
    %254 = vst.msk [vmem:[%s9] sm:$0xff] %vm251, %v246
    %255 = vst.msk [vmem:[%s9 + $0x8] sm:$0xff] %vm251, %v248
    // Predicated region
    $region30: #{encoder_forward.1} parent=1 // pred_check
      _
    $region31: #{encoder_forward.1} parent=1 // pred_check_branch
      %257 = sbr.rel (0) target = $region33
    $region32: #{encoder_forward.1} parent=1 // pred_region
      %s259 = ssub.s32 256, 256
      %260 = vsyncadd [#allocation4], %s259
      %s261 = sshll.u32 [#allocation3], 4
      %s262 = int_to_ptr.vmem [resolvable:$true] %s261
      %267 = dma.vmem_to_hbm [thread:$0]  %s262, 256, %s7, [#allocation4], 128, 128, 8
    $region33: #{encoder_forward.1} parent=1 // pred_fallthru
      _
    // Predicated region
    $region34: #{encoder_forward.1} parent=1 // pred_check
      _
    $region35: #{encoder_forward.1} parent=1 // pred_check_branch
      %269 = sbr.rel (0) target = $region37
    $region36: #{encoder_forward.1} parent=1 // pred_region
      _
    $region37: #{encoder_forward.1} parent=1 // pred_fallthru
      _
    // Predicated region
    $region38: #{encoder_forward.1} parent=1 // pred_check
      _
    $region39: #{encoder_forward.1} parent=1 // pred_check_branch
      %271 = sbr.rel (0) target = $region41
    $region40: #{encoder_forward.1} parent=1 // pred_region
      _
    $region41: #{encoder_forward.1} parent=1 // pred_fallthru
      _
    // Predicated region
    $region42: #{encoder_forward.1} parent=1 // pred_check
      _
    $region43: #{encoder_forward.1} parent=1 // pred_check_branch
      %273 = sbr.rel (0) target = $region45
    $region44: #{encoder_forward.1} parent=1 // pred_region
      %274 = dma.done [#allocation4], 256
    $region45: #{encoder_forward.1} parent=1 // pred_fallthru
      _
    // Predicated region
    $region46: #{encoder_forward.1} parent=1 // pred_check
      _
    $region47: #{encoder_forward.1} parent=1 // pred_check_branch
      %276 = sbr.rel (0) target = $region49
    $region48: #{encoder_forward.1} parent=1 // pred_region
      _
    $region49: #{encoder_forward.1} parent=1 // pred_fallthru
      _
    // Predicated region
    $region50: #{encoder_forward.1} parent=1 // pred_check
      _
    $region51: #{encoder_forward.1} parent=1 // pred_check_branch
      %278 = sbr.rel (0) target = $region53
    $region52: #{encoder_forward.1} parent=1 // pred_region
      _
    $region53: #{encoder_forward.1} parent=1 // pred_fallthru
      _
    %279 = vsyncpa [#allocation4], 1

</llo_original>
